<compile_context>
chip_gen: v7x
topology: tpu7x:2x2x1
jax: 0.10.0
libtpu: 0.0.40
codegen_flags: <defaults>
</compile_context>

<pallas_src>
import functools

import jax
import jax.numpy as jnp
from jax.experimental import pallas as pl
from jax.experimental.pallas import tpu as pltpu


def fm_kernel(x_ref, o_ref, *, num_fields, embed_dim):
    """x_ref: (TB, F*D) lane-dense tile.  o_ref: (1, TB) lane-dense output row."""
    x = x_ref[...]                                           # (TB, F*D), native dtype

    # Fused per-field accumulation in f32 (cast each slice once, before squaring,
    # so both the s and q paths round identically -- matters for bf16 inputs).
    x0 = x[:, 0:embed_dim].astype(jnp.float32)               # (TB, D)
    s = x0                                                    # sum_f x_f
    q = x0 * x0                                               # sum_f x_f^2
    for f in range(1, num_fields):
        xf = x[:, f * embed_dim:(f + 1) * embed_dim].astype(jnp.float32)
        s = s + xf
        q = q + xf * xf

    # Single cross-lane reduce over D (XLU), instead of one over F*D plus one over D.
    out = 0.5 * jnp.sum(s * s - q, axis=-1)                   # (TB,) f32
    o_ref[0, :] = out.astype(o_ref.dtype)


def _choose_tile_rows(batch, flat_dim, itemsize,
                      per_buffer_bytes=8 * 1024 * 1024):
    """Rows per batch tile.

    ~8 MiB per input buffer (16 MiB double-buffered) -- big enough that the
    fixed ~0.35 us per-grid-step overhead is <10% even at v7x HBM rates, and
    well inside the explicit 48 MiB vmem limit on every generation.  Caps the
    tile so there are >= 2 grid steps whenever B >= 256, so the pipeline
    actually overlaps DMA with compute.
    """
    if batch <= 128:
        return batch                                  # single tile, block == full dims
    rows = per_buffer_bytes // max(1, flat_dim * itemsize)
    rows = max(128, (rows // 128) * 128)              # lane-aligned output-slab width
    if batch >= 256:
        # Force at least 2 grid steps (prefer more) so DMA/compute overlap exists.
        max_rows_for_overlap = max(128, (batch // (2 * 128)) * 128)
        rows = min(rows, max_rows_for_overlap)
    return int(rows)


def fm_forward(x, *, tb=None):
    """FM pairwise-interaction forward. x: (B, F, D) float array -> (B, 1)."""
    B, F, D = x.shape
    fd = F * D
    itemsize = jnp.dtype(x.dtype).itemsize
    x2 = x.reshape(B, fd)                             # lane-dense, contiguous reshape

    if tb is None:
        tb = _choose_tile_rows(B, fd, itemsize)
    if tb >= B:
        tb = B                                        # single tile: block == full dims
        n_tiles = 1
    else:
        tb = max(128, (tb // 128) * 128)              # sublane/lane aligned tile rows
        n_tiles = pl.cdiv(B, tb)

    # NOTE (invariant): for ragged B the last input block reads rows past B
    # whose contents are unspecified.  Each row only influences its own output
    # element, and those elements are discarded by the [:B] slice below.  Any
    # future change that reduces ACROSS rows inside the kernel must mask the
    # tail rows explicitly.
    kernel = functools.partial(fm_kernel, num_fields=F, embed_dim=D)
    out_tiles = pl.pallas_call(
        kernel,
        out_shape=jax.ShapeDtypeStruct((n_tiles, tb), x.dtype),
        grid=(n_tiles,),
        in_specs=[pl.BlockSpec((tb, fd), lambda i: (i, 0))],
        out_specs=pl.BlockSpec((1, tb), lambda i: (i, 0)),
        compiler_params=pltpu.CompilerParams(
            dimension_semantics=("parallel",),
            vmem_limit_bytes=48 * 1024 * 1024),
        cost_estimate=pl.CostEstimate(
            flops=3 * B * F * D,
            transcendentals=0,
            bytes_accessed=B * fd * itemsize + B * itemsize),
    )(x2)
    return out_tiles.reshape(n_tiles * tb, 1)[:B]


def fm_reference(x):
    s = jnp.sum(x, axis=1, keepdims=True)
    square_of_sum = s * s
    sum_of_square = jnp.sum(x * x, axis=1, keepdims=True)
    cross_term = square_of_sum - sum_of_square
    return 0.5 * jnp.sum(cross_term, axis=2)


if __name__ == "__main__":
    # Small shape consistent with the module: batch=2, num_fields=4, embed=32.
    B, F, D = 2, 4, 32
    x = jax.random.normal(jax.random.PRNGKey(0), (B, F, D), dtype=jnp.float32)
    out = jax.block_until_ready(fm_forward(x))
    ref = fm_reference(x)
    assert out.shape == (B, 1), out.shape
    assert jnp.allclose(out, ref, atol=1e-3, rtol=1e-4), (out, ref)

    # Exercise the tiled, ragged multi-grid-step path (B % tb != 0, no padding).
    B2, F2, D2 = 300, 6, 64
    x2 = jax.random.normal(jax.random.PRNGKey(1), (B2, F2, D2), dtype=jnp.float32)
    out2 = jax.block_until_ready(fm_forward(x2, tb=128))
    ref2 = fm_reference(x2)
    assert out2.shape == (B2, 1), out2.shape
    assert jnp.allclose(out2, ref2, atol=1e-3, rtol=1e-4), (out2, ref2)

    # bf16 path: verify the symmetric cast-before-square accumulation.
    x3 = jax.random.normal(jax.random.PRNGKey(2), (B2, F2, D2), dtype=jnp.bfloat16)
    out3 = jax.block_until_ready(fm_forward(x3, tb=128))
    ref3 = fm_reference(x3.astype(jnp.float32)).astype(jnp.bfloat16)
    assert out3.shape == (B2, 1), out3.shape
    assert jnp.allclose(out3.astype(jnp.float32), ref3.astype(jnp.float32),
                        atol=2e-1, rtol=2e-2), (out3, ref3)

    print("KERNEL_OK")
</pallas_src>

<mosaic_0001>
module attributes {stable_mosaic.version = 11 : i64} {
  func.func @fm_kernel(%arg0: i32, %arg1: memref<2x128xf32, #tpu.memory_space<vmem>>, %arg2: memref<1x2xf32, #tpu.memory_space<vmem>>) attributes {dimension_semantics = [#tpu.dimension_semantics<parallel>], iteration_bounds = array<i64: 1>, scalar_prefetch = 0 : i64, scratch_operands = 0 : i64, tpu.core_type = #tpu.core_type<tc>, window_params = [{transform_indices = @transform_0, window_bounds = array<i64: 2, 128>}, {transform_indices = @transform_1, window_bounds = array<i64: 1, 2>}]} {
    %c0 = arith.constant 0 : index
    %c0_0 = arith.constant 0 : index
    %0 = vector.load %arg1[%c0, %c0_0] : memref<2x128xf32, #tpu.memory_space<vmem>>, vector<2x128xf32>
    %1 = vector.extract_strided_slice %0 {offsets = [0, 0], sizes = [2, 32], strides = [1, 1]} : vector<2x128xf32> to vector<2x32xf32>
    %2 = arith.mulf %1, %1 : vector<2x32xf32>
    %3 = vector.extract_strided_slice %0 {offsets = [0, 32], sizes = [2, 32], strides = [1, 1]} : vector<2x128xf32> to vector<2x32xf32>
    %4 = arith.addf %1, %3 : vector<2x32xf32>
    %5 = arith.mulf %3, %3 : vector<2x32xf32>
    %6 = arith.addf %2, %5 : vector<2x32xf32>
    %7 = vector.extract_strided_slice %0 {offsets = [0, 64], sizes = [2, 32], strides = [1, 1]} : vector<2x128xf32> to vector<2x32xf32>
    %8 = arith.addf %4, %7 : vector<2x32xf32>
    %9 = arith.mulf %7, %7 : vector<2x32xf32>
    %10 = arith.addf %6, %9 : vector<2x32xf32>
    %11 = vector.extract_strided_slice %0 {offsets = [0, 96], sizes = [2, 32], strides = [1, 1]} : vector<2x128xf32> to vector<2x32xf32>
    %12 = arith.addf %8, %11 : vector<2x32xf32>
    %13 = arith.mulf %11, %11 : vector<2x32xf32>
    %14 = arith.addf %10, %13 : vector<2x32xf32>
    %15 = arith.mulf %12, %12 : vector<2x32xf32>
    %16 = arith.subf %15, %14 : vector<2x32xf32>
    %cst = arith.constant dense<0.000000e+00> : vector<2xf32>
    %17 = vector.multi_reduction <add>, %16, %cst [1] : vector<2x32xf32> to vector<2xf32>
    %cst_1 = arith.constant 5.000000e-01 : f32
    %18 = vector.broadcast %cst_1 : f32 to vector<2xf32>
    %19 = arith.mulf %18, %17 : vector<2xf32>
    %c0_2 = arith.constant 0 : index
    %c0_3 = arith.constant 0 : index
    %20 = vector.load %arg2[%c0_2, %c0_3] : memref<1x2xf32, #tpu.memory_space<vmem>>, vector<1x2xf32>
    %21 = vector.shape_cast %20 : vector<1x2xf32> to vector<2xf32>
    %22 = vector.shape_cast %19 : vector<2xf32> to vector<1x2xf32>
    tpu.vector_store %arg2[%c0_2, %c0_3], %22 {strides = array<i32>} : memref<1x2xf32, #tpu.memory_space<vmem>>, vector<1x2xf32>,
    return
  }
  func.func @transform_0(%arg0: i32) -> (i32, i32) {
    %c0_i32 = arith.constant 0 : i32
    %c0_i32_0 = arith.constant 0 : i32
    return %arg0, %c0_i32 : i32, i32
  }
  func.func @transform_1(%arg0: i32) -> (i32, i32) {
    %c0_i32 = arith.constant 0 : i32
    %c0_i32_0 = arith.constant 0 : i32
    return %arg0, %c0_i32 : i32, i32
  }
}

</mosaic_0001>

<llo_original>
// kernel: tpu_custom_call.1
$region0: #{tpu_custom_call.1}
  #allocation0 [shape = 'u32[]', space=smem, size = 0x4, offset = 0x4, fixed_abs, tag = 'smem constant byte address 0x4 - core index']
  #allocation1 [shape = 'u32[144,128]{1,0:T(1,128)}', space=vmem, size = 0x12000, scoped, tag = 'internal scratch']
  %s0 = inlined_call_operand.hbm [shape: f32[2,128], index: 0, kind: input, shape index: {}]
  %s1 = inlined_call_operand.hbm [shape: f32[1,2], index: 1, kind: output, shape index: {}]
  %s2 = sld [smem:[#allocation0]]
  $region18: #{tpu_custom_call.1} parent=0
    _
  %s4 = ssub.s32 1, %s2
  %s5 = scalar_select 0, %s4, %s2
  $region1: #{tpu_custom_call.1} parent=0
    #allocation2 [shape = 'u8[1024]{0}', space=vmem, size = 0x400, scoped, tag = 'input window, operand 0, single buffered']
    #allocation3 [shape = 's32[1]{0}', space=sflag, size = 0x4, scoped, tag = 'scoped memory for tpu_custom_call.1']
    #allocation4 [shape = 's32[1]{0}', space=sflag, size = 0x4, scoped, tag = 'scoped memory for tpu_custom_call.1']
    #allocation5 [shape = 'u8[512]{0}', space=vmem, size = 0x400, scoped, tag = 'output window, operand 0, single buffered']
    %6 = vsyncpa [#allocation3], 0
    %7 = vsyncpa [#allocation4], 0
    // Predicated region
    $region2: #{tpu_custom_call.1} parent=1 // pred_check
      _
    $region3: #{tpu_custom_call.1} parent=1 // pred_check_branch
      %9 = sbr.rel (0) target = $region5
    $region4: #{tpu_custom_call.1} parent=1 // pred_region
      %s11 = ssub.s32 32, 32
      %12 = vsyncadd [#allocation3], %s11
      %s14 = sshll.u32 [#allocation2], 4
      %s15 = int_to_ptr.vmem [resolvable:$true] %s14
      %17 = dma.hbm_to_vmem [thread:$0]  %s0, 32, %s15, [#allocation3]
    $region5: #{tpu_custom_call.1} parent=1 // pred_fallthru
      _
    // Predicated region
    $region6: #{tpu_custom_call.1} parent=1 // pred_check
      _
    $region7: #{tpu_custom_call.1} parent=1 // pred_check_branch
      %19 = sbr.rel (0) target = $region9
    $region8: #{tpu_custom_call.1} parent=1 // pred_region
      %20 = dma.done [#allocation3], 32
    $region9: #{tpu_custom_call.1} parent=1 // pred_fallthru
      _
    %v21 = vld [vmem:[#allocation2] sm:$0x3]
    %v22 = vmul.f32 %v21, %v21
    %24 = vrot.lane.b32.xlu0 %v21, 96
    %v25 = vpop.permute.xlu0 %24
    %v27 = vadd.f32 %v21, %v25
    %29 = vrot.lane.b32.xlu0 %v22, 96
    %v30 = vpop.permute.xlu0 %29
    %v32 = vadd.f32 %v22, %v30
    %33 = vrot.lane.b32.xlu0 %v21, 64
    %v34 = vpop.permute.xlu0 %33
    %v36 = vadd.f32 %v27, %v34
    %37 = vrot.lane.b32.xlu0 %v22, 64
    %v38 = vpop.permute.xlu0 %37
    %v40 = vadd.f32 %v32, %v38
    %41 = vrot.lane.b32.xlu0 %v21, 32
    %v42 = vpop.permute.xlu0 %41
    %v44 = vadd.f32 %v36, %v42
    %45 = vrot.lane.b32.xlu0 %v22, 32
    %v46 = vpop.permute.xlu0 %45
    %v48 = vadd.f32 %v40, %v46
    %v49 = vmul.f32 %v44, %v44
    %v50 = vsub.f32 %v49, %v48
    %vm51 = vcmask 254976
    %v52 = vsel %vm51, %v50, 0.0
    %53 = vadd.xlane.f32.xlu0 %v52
    %v54 = vpop.xlane.xlu0 %53
    %v55 = vmul.f32 %v54, 0.5
    %v57 = vlaneseq
    %v58 = vand.u32 %v57, 127
    %v59 = vlaneseq
    %v60 = vshrl.u32 %v59, 7
    %v61 = vsub.s32 %v58, %v60
    %v62 = vrot.slane %v55, %v61
    %vm64 = vcmask 8192
    %65 = vst.msk [vmem:[#allocation5] sm:$0x1] %vm64, %v62
    // Predicated region
    $region10: #{tpu_custom_call.1} parent=1 // pred_check
      _
    $region11: #{tpu_custom_call.1} parent=1 // pred_check_branch
      %67 = sbr.rel (0) target = $region13
    $region12: #{tpu_custom_call.1} parent=1 // pred_region
      %s69 = ssub.s32 16, 16
      %70 = vsyncadd [#allocation4], %s69
      %s72 = sshll.u32 [#allocation5], 4
      %s73 = int_to_ptr.vmem [resolvable:$true] %s72
      %75 = dma.vmem_to_hbm [thread:$0]  %s73, 16, %s1, [#allocation4]
    $region13: #{tpu_custom_call.1} parent=1 // pred_fallthru
      _
    // Predicated region
    $region14: #{tpu_custom_call.1} parent=1 // pred_check
      _
    $region15: #{tpu_custom_call.1} parent=1 // pred_check_branch
      %77 = sbr.rel (0) target = $region17
    $region16: #{tpu_custom_call.1} parent=1 // pred_region
      %78 = dma.done [#allocation4], 16
    $region17: #{tpu_custom_call.1} parent=1 // pred_fallthru
      _
    %79 = vsyncpa [#allocation3], 1
    %80 = vsyncpa [#allocation4], 1

</llo_original>
